<compile_context>
chip_gen: v6e
topology: v6e:2x2x1
jax: 0.10.0
libtpu: 0.0.40
codegen_flags: <defaults>
</compile_context>

<pallas_src>
import jax
import jax.numpy as jnp
from jax.experimental import pallas as pl
from jax.experimental.pallas import tpu as pltpu

_LANES = 128
_SUBLANES = 8
# Below one (8,128) tile worth of elements, a fused broadcast beats any kernel.
_MIN_PALLAS_ELEMS = _SUBLANES * _LANES  # 1024


def _single_variance_fill_kernel(var_ref, o_ref):
    # var_ref: (1,) learnable scalar parameter in SMEM
    # o_ref:   (block_rows, 128) lane-dense output block in VMEM
    s = jnp.exp(var_ref[0] * 10.0)          # one EUP op per block (free filler)
    o_ref[...] = jnp.full(o_ref.shape, s, dtype=o_ref.dtype)


def single_variance_network(x: jax.Array, variance,
                            *, max_block_rows: int = 16384) -> jax.Array:
    """Pallas equivalent of SingleVarianceNetwork.forward.

    x:        (N, ...) array (only N = x.shape[0] is used, like len(x))
    variance: scalar parameter (Python float, 0-d array, or ()-shaped array)
    returns:  (N, 1) float32 = exp(variance * 10.0) broadcast
    """
    n = int(x.shape[0])
    variance = jnp.asarray(variance, dtype=jnp.float32)
    scale = jnp.exp(variance * 10.0)

    # Small (or empty) N: skip the kernel entirely; XLA fuses this constant
    # broadcast into whatever consumes it.
    if n < _MIN_PALLAS_ELEMS:
        return jnp.broadcast_to(scale, (n, 1)).astype(jnp.float32)

    # Lane-dense slab: rows of 128 lanes; rows is exact (no padded-row writes).
    rows = pl.cdiv(n, _LANES)                       # >= 8 here

    # Adaptive block sizing:
    #  - at least 2 blocks once rows >= 16 (lets v7x's two TCs split the loop)
    #  - block rows rounded up to a sublane multiple, capped at max_block_rows
    max_block_rows = max(_SUBLANES, (max_block_rows // _SUBLANES) * _SUBLANES)
    min_blocks = 2 if rows >= 16 else 1
    num_blocks = max(min_blocks, pl.cdiv(rows, max_block_rows))
    br = pl.cdiv(rows, num_blocks)
    br = ((br + _SUBLANES - 1) // _SUBLANES) * _SUBLANES
    br = min(br, max_block_rows)
    grid = (pl.cdiv(rows, br),)

    var1d = jnp.reshape(variance, (1,))

    slab = pl.pallas_call(
        _single_variance_fill_kernel,
        out_shape=jax.ShapeDtypeStruct((rows, _LANES), jnp.float32),
        grid=grid,
        in_specs=[
            # scalar parameter lives in SMEM, passed whole to every grid step
            pl.BlockSpec(memory_space=pltpu.MemorySpace.SMEM),
        ],
        out_specs=pl.BlockSpec((br, _LANES), lambda i: (i, 0)),
        compiler_params=pltpu.CompilerParams(
            dimension_semantics=("parallel",),
            vmem_limit_bytes=32 * 1024 * 1024,   # headroom for 2x8 MiB output bufs
        ),
    )(var1d)

    # Row-major contiguous: this reshape is a bitcast.  When n % 128 == 0 the
    # slice is the identity (zero-copy return); otherwise it trims <=127 pads.
    return slab.reshape(rows * _LANES, 1)[:n]


if __name__ == "__main__":
    key = jax.random.PRNGKey(0)
    init_val = 0.3
    variance = jnp.asarray(init_val, dtype=jnp.float32)
    expected = jnp.exp(variance * 10.0)

    # (1) Typical tiny NeuS batch (8 points, 3 coords) -> fused-broadcast path.
    x_small = jax.random.normal(key, (8, 3), dtype=jnp.float32)
    out_small = jax.block_until_ready(single_variance_network(x_small, variance))
    ref_small = jnp.ones((8, 1), jnp.float32) * expected
    assert out_small.shape == (8, 1) and out_small.dtype == jnp.float32
    assert jnp.allclose(out_small, ref_small, rtol=1e-6, atol=1e-6)

    # (2) 128-aligned N -> Pallas path, multi-block grid, zero-copy return.
    n_aligned = 128 * 256
    x_aligned = jnp.zeros((n_aligned, 3), jnp.float32)
    out_aligned = jax.block_until_ready(single_variance_network(x_aligned, variance))
    assert out_aligned.shape == (n_aligned, 1) and out_aligned.dtype == jnp.float32
    assert jnp.allclose(out_aligned[0, 0], expected, rtol=1e-6)
    assert jnp.allclose(out_aligned[-1, 0], expected, rtol=1e-6)

    # (3) Non-128-aligned N, parameter passed as a plain Python float.
    n_odd = 128 * 100 + 37
    x_odd = jnp.zeros((n_odd, 3), jnp.float32)
    out_odd = jax.block_until_ready(single_variance_network(x_odd, init_val))
    assert out_odd.shape == (n_odd, 1) and out_odd.dtype == jnp.float32
    assert jnp.allclose(out_odd, expected, rtol=1e-6, atol=1e-6)

    print("KERNEL_OK")
</pallas_src>

<mosaic_0001>
module attributes {stable_mosaic.version = 11 : i64} {
  func.func @_single_variance_fill_kernel(%arg0: i32, %arg1: memref<1xf32, #tpu.memory_space<smem>>, %arg2: memref<128x128xf32, #tpu.memory_space<vmem>>) attributes {dimension_semantics = [#tpu.dimension_semantics<parallel>], iteration_bounds = array<i64: 2>, scalar_prefetch = 0 : i64, scratch_operands = 0 : i64, tpu.core_type = #tpu.core_type<tc>, window_params = [{transform_indices = @transform_0, window_bounds = array<i64: 1>}, {transform_indices = @transform_1, window_bounds = array<i64: 128, 128>}]} {
    %c0 = arith.constant 0 : index
    %0 = memref.load %arg1[%c0] : memref<1xf32, #tpu.memory_space<smem>>
    %cst = arith.constant 1.000000e+01 : f32
    %1 = arith.mulf %0, %cst : f32
    %2 = math.exp %1 : f32
    %3 = vector.broadcast %2 : f32 to vector<128x128xf32>
    %c0_0 = arith.constant 0 : index
    %c0_1 = arith.constant 0 : index
    %4 = vector.load %arg2[%c0_0, %c0_1] : memref<128x128xf32, #tpu.memory_space<vmem>>, vector<128x128xf32>
    tpu.vector_store %arg2[%c0_0, %c0_1], %3 {strides = array<i32>} : memref<128x128xf32, #tpu.memory_space<vmem>>, vector<128x128xf32>,
    return
  }
  func.func @transform_0(%arg0: i32) -> i32 {
    %c0_i32 = arith.constant 0 : i32
    %c0_i32_0 = arith.constant 0 : i32
    return %c0_i32 : i32
  }
  func.func @transform_1(%arg0: i32) -> (i32, i32) {
    %c0_i32 = arith.constant 0 : i32
    %c0_i32_0 = arith.constant 0 : i32
    return %arg0, %c0_i32 : i32, i32
  }
}

</mosaic_0001>

<llo_original>
// kernel: tpu_custom_call.1
$region0: #{tpu_custom_call.1}
  #allocation0 [shape = 'u32[]', space=smem, size = 0x4, offset = 0x4, fixed_abs, tag = 'smem constant byte address 0x4 - core index']
  #allocation1 [shape = 'u32[144,128]{1,0:T(1,128)}', space=vmem, size = 0x12000, scoped, tag = 'internal scratch']
  #allocation2 [shape = 'f32[1]{0:T(128)S(6)}', space=smem, size = 0x200, scoped, tag = 'scoped memory for tpu_custom_call.1']
  %s0 = inlined_call_operand.<no memory space> [shape: f32[1], index: 0, kind: input, shape index: {}]
  %s1 = inlined_call_operand.hbm [shape: f32[256,128], index: 1, kind: output, shape index: {}]
  %s2 = sld [smem:[#allocation0]]
  $region37: #{tpu_custom_call.1} parent=0
    _
  %s4 = ssub.s32 1, %s2
  %s5 = scalar_select 0, %s4, %s2
  %6 = sst [smem:[#allocation2]] %s0
  $region1: #{tpu_custom_call.1} parent=0
    #allocation3 [shape = 'u8[131072]{0}', space=vmem, size = 0x20000, scoped, tag = 'output window, operand 0']
    #allocation4 [shape = 's32[2]{0}', space=sflag, size = 0x8, scoped, tag = 'scoped memory for tpu_custom_call.1']
    %7 = vsyncpa [#allocation4], 0
    %s8 = scalar_lea.sflag [#allocation4], 1
    %9 = vsyncpa %s8, 0
    loop: start=0, step=1, limit=4
    $region2: #{tpu_custom_call.1} parent=1 // loop_pre_header
      _
    $region3: #{tpu_custom_call.1} parent=1 // loop_header
      %s11 = sphi 0, %s15
      %p12 = scmp.ge.s32.totalorder %s11, 4
      %s19 = sphi 0, %s19
      %s21 = sphi 0, %s19
      %s22 = sphi 0, %s21
      %s36 = sphi 0, %s22
      %s42 = sphi 0, %s44
      %s45 = sphi 0, %s42
      %s46 = sphi 0, %s45
      %s62 = sphi 0, %s46
    $region4: #{tpu_custom_call.1} parent=1 // loop_header_branch
      %14 = sbr.rel (%p12) target = $region8
    $region5: #{tpu_custom_call.1} parent=1 // loop_body
      %s16 = ssub.s32 %s11, 1
      %s17 = ssub.s32 %s11, 2
      %s18 = sadd.s32 %s11, 1
      %s20 = sadd.s32 %s19, 1
      %p23 = scmp.eq.s32.totalorder %s11, 1
      %p24 = scmp.ne.s32.totalorder %s19, %s21
      %p25 = scmp.eq.s32.totalorder %s11, 0
      %p26 = por %p24, %p25
      %p27 = scmp.ne.s32.totalorder %s19, %s21
      %p28 = scmp.eq.s32.totalorder %s16, 1
      %p29 = por %p27, %p28
      %p30 = scmp.ne.s32.totalorder %s21, %s22
      %p31 = scmp.eq.s32.totalorder %s16, 0
      %p32 = por %p30, %p31
      %p33 = scmp.ne.s32.totalorder %s21, %s22
      %p34 = scmp.eq.s32.totalorder %s17, 1
      %p35 = por %p33, %p34
      %p37 = scmp.ne.s32.totalorder %s22, %s36
      %p38 = scmp.eq.s32.totalorder %s17, 0
      %p39 = por %p37, %p38
      %s40 = ssub.s32 %s11, %s18
      %p41 = scmp.eq.s32.totalorder %s40, 0
      %s43 = sadd.s32 %s42, 1
      %s44 = scalar_select %p41, %s42, %s43
      %p47 = pneg %p41
      %p48 = scmp.eq.s32.totalorder %s11, 1
      %p49 = por %p47, %p48
      %p50 = scmp.ne.s32.totalorder %s42, %s45
      %p51 = scmp.eq.s32.totalorder %s11, 0
      %p52 = por %p50, %p51
      %p53 = scmp.ne.s32.totalorder %s42, %s45
      %p54 = scmp.eq.s32.totalorder %s16, 1
      %p55 = por %p53, %p54
      %p56 = scmp.ne.s32.totalorder %s45, %s46
      %p57 = scmp.eq.s32.totalorder %s16, 0
      %p58 = por %p56, %p57
      %p59 = scmp.ne.s32.totalorder %s45, %s46
      %p60 = scmp.eq.s32.totalorder %s17, 1
      %p61 = por %p59, %p60
      %p63 = scmp.ne.s32.totalorder %s46, %s62
      %p64 = scmp.eq.s32.totalorder %s17, 0
      %p65 = por %p63, %p64
      %p66 = scmp.le.s32.totalorder 1, %s11
      %p67 = scmp.lt.s32.totalorder %s11, 3
      %p68 = pnand %p66, %p67
      %p69 = pneg %p68
      // Predicated region
      $region9: #{tpu_custom_call.1} parent=5 // pred_check
        _
      $region10: #{tpu_custom_call.1} parent=5 // pred_check_branch
        %71 = sbr.rel (%p68) target = $region12
      $region11: #{tpu_custom_call.1} parent=5 // pred_region
        %s72 = ssub.s32 %s11, 1
        // Predicated region
        $region13: #{tpu_custom_call.1} parent=11 // pred_check
          %p73 = pneg %p32
        $region14: #{tpu_custom_call.1} parent=11 // pred_check_branch
          %75 = sbr.rel (%p73) target = $region16
        $region15: #{tpu_custom_call.1} parent=11 // pred_region
          _
        $region16: #{tpu_custom_call.1} parent=11 // pred_fallthru
          _
      $region12: #{tpu_custom_call.1} parent=5 // pred_fallthru
        _
      %p76 = scmp.lt.s32.totalorder %s11, 2
      // Predicated region
      $region17: #{tpu_custom_call.1} parent=5 // pred_check
        %p77 = pneg %p76
      $region18: #{tpu_custom_call.1} parent=5 // pred_check_branch
        %79 = sbr.rel (%p77) target = $region20
      $region19: #{tpu_custom_call.1} parent=5 // pred_region
        _
      $region20: #{tpu_custom_call.1} parent=5 // pred_fallthru
        _
      %p80 = scmp.le.s32.totalorder 1, %s11
      %p81 = scmp.lt.s32.totalorder %s11, 3
      %p82 = pnand %p80, %p81
      %p83 = pneg %p82
      // Predicated region
      $region21: #{tpu_custom_call.1} parent=5 // pred_check
        _
      $region22: #{tpu_custom_call.1} parent=5 // pred_check_branch
        %85 = sbr.rel (%p82) target = $region24
      $region23: #{tpu_custom_call.1} parent=5 // pred_region
        %s86 = ssub.s32 %s11, 1
        %p87 = pneg %p32
        %p88 = pneg %p29
        %p89 = pneg %p58
        %p90 = pneg %p55
        %s91 = sand.u32 %s45, 1
        %s92 = scalar_lea.sflag [#allocation4], %s91
        %s93 = sand.u32 %s45, 1
        %s94 = smul.addr %s93, 128
        %s95 = scalar_lea.vmem [#allocation3], %s94
        %s96 = smul.u32 16, %s16
        %s97 = sld [smem:[#allocation2]]
        %s98 = smul.f32 %s97, 10.0
        %v99 = vstv %s98
        %v100 = vmul.f32 %v99, 1.442695
        %v101 = vpow.pop %v100
        %s102 = vtos %v101
        %v103 = vstv %s102
        %104 = vst [vmem:[%s95] sm:$0xff] %v103
        %105 = vst [vmem:[%s95 + $0x8] sm:$0xff] %v103
        %106 = vst [vmem:[%s95 + $0x10] sm:$0xff] %v103
        %107 = vst [vmem:[%s95 + $0x18] sm:$0xff] %v103
        %108 = vst [vmem:[%s95 + $0x20] sm:$0xff] %v103
        %109 = vst [vmem:[%s95 + $0x28] sm:$0xff] %v103
        %110 = vst [vmem:[%s95 + $0x30] sm:$0xff] %v103
        %111 = vst [vmem:[%s95 + $0x38] sm:$0xff] %v103
        %112 = vst [vmem:[%s95 + $0x40] sm:$0xff] %v103
        %113 = vst [vmem:[%s95 + $0x48] sm:$0xff] %v103
        %114 = vst [vmem:[%s95 + $0x50] sm:$0xff] %v103
        %115 = vst [vmem:[%s95 + $0x58] sm:$0xff] %v103
        %116 = vst [vmem:[%s95 + $0x60] sm:$0xff] %v103
        %117 = vst [vmem:[%s95 + $0x68] sm:$0xff] %v103
        %118 = vst [vmem:[%s95 + $0x70] sm:$0xff] %v103
        %119 = vst [vmem:[%s95 + $0x78] sm:$0xff] %v103
        %s120 = sand.u32 %s45, 1
        %s121 = scalar_lea.sflag [#allocation4], %s120
        %s122 = sand.u32 %s45, 1
        %s123 = smul.addr %s122, 128
        %s124 = scalar_lea.vmem [#allocation3], %s123
        // Predicated region
        $region25: #{tpu_custom_call.1} parent=23 // pred_check
          %p125 = pneg %p55
        $region26: #{tpu_custom_call.1} parent=23 // pred_check_branch
          %127 = sbr.rel (%p125) target = $region28
        $region27: #{tpu_custom_call.1} parent=23 // pred_region
          %s128 = smul.u32 16, %s16
          %s130 = ssub.s32 2048, 2048
          %131 = vsyncadd %s121, %s130
          %s132 = smul.addr %s128, 128
          %s133 = scalar_lea.hbm %s1, %s132
          %s134 = sshll.u32 %s124, 4
          %s135 = int_to_ptr.vmem [resolvable:$true] %s134
          %140 = dma.vmem_to_hbm [thread:$0]  %s135, 2048, %s133, %s121, 128, 128, 8
        $region28: #{tpu_custom_call.1} parent=23 // pred_fallthru
          _
      $region24: #{tpu_custom_call.1} parent=5 // pred_fallthru
        _
      %p141 = scmp.le.s32.totalorder 2, %s11
      // Predicated region
      $region29: #{tpu_custom_call.1} parent=5 // pred_check
        %p142 = pneg %p141
      $region30: #{tpu_custom_call.1} parent=5 // pred_check_branch
        %144 = sbr.rel (%p142) target = $region32
      $region31: #{tpu_custom_call.1} parent=5 // pred_region
        %s145 = ssub.s32 %s11, 2
        // Predicated region
        $region33: #{tpu_custom_call.1} parent=31 // pred_check
          %p146 = pneg %p61
        $region34: #{tpu_custom_call.1} parent=31 // pred_check_branch
          %148 = sbr.rel (%p146) target = $region36
        $region35: #{tpu_custom_call.1} parent=31 // pred_region
          %s149 = sand.u32 %s46, 1
          %s150 = scalar_lea.sflag [#allocation4], %s149
          %s151 = sand.u32 %s46, 1
          %s152 = smul.addr %s151, 128
          %s153 = scalar_lea.vmem [#allocation3], %s152
          %154 = dma.done %s150, 2048
        $region36: #{tpu_custom_call.1} parent=31 // pred_fallthru
          _
      $region32: #{tpu_custom_call.1} parent=5 // pred_fallthru
        _
    $region6: #{tpu_custom_call.1} parent=1 // loop_footer
      %s15 = sadd.s32 1, %s11
    $region7: #{tpu_custom_call.1} parent=1 // loop_footer_branch
      %10 = sbr.rel target = $region3
    $region8: #{tpu_custom_call.1} parent=1 // loop_exit
      _
    %155 = vsyncpa [#allocation4], 1
    %s156 = scalar_lea.sflag [#allocation4], 1
    %157 = vsyncpa %s156, 1

</llo_original>
